<compile_context>
chip_gen: v5e
topology: v5e:2x2
jax: 0.10.0
libtpu: 0.0.40
codegen_flags: <defaults>
</compile_context>

<pallas_src>
import jax
import jax.numpy as jnp
import numpy as np
from jax.experimental import pallas as pl
from jax.experimental.pallas import tpu as pltpu

NEG_SLOPE = 0.2  # GATConv leaky_relu negative_slope default


def _round_up(x, m):
    return -(-int(x) // m) * m


def make_gat_kernel(num_heads, out_feats, out_width, use_bf16):
    H, D, W = num_heads, out_feats, out_width
    HD = H * D
    cdt = jnp.bfloat16 if use_bf16 else jnp.float32

    def kernel(adj_bias_ref, el_ref, er_ref, zaug_ref, bias_ref, out_ref):
        # adj_bias_ref: [TM, N]   bf16 additive mask (0 on edges incl. self-loops, -1e30 else)
        # el_ref:       [H, N]    f32  source-side attention logits
        # er_ref:       [TM, H]   f32  destination-side attention logits (row tile)
        # zaug_ref:     [H, N, W] bf16 head h's features in cols [h*D:(h+1)*D], ones at col HD
        # bias_ref:     [1, W]    f32  explicit GATConv bias in cols [0:HD], zeros elsewhere
        # out_ref:      [TM, W]   f32
        adj_bias = adj_bias_ref[...]
        if not use_bf16:
            adj_bias = adj_bias.astype(jnp.float32)          # v5e path: f32 VPU only
        el_all = el_ref[...].astype(cdt)                     # small casts, hoisted
        er_all = er_ref[...].astype(cdt)
        neg = jnp.asarray(NEG_SLOPE, dtype=cdt)

        acc = None
        for h in range(H):  # H is a small static constant -> unrolled
            # e[v, u] = leaky_relu(el[u] + er[v]) for edge u -> v, masked additively
            e = er_all[:, h:h + 1] + el_all[h:h + 1, :]      # [TM, N] pure VPU broadcasts
            e = jnp.where(e > 0, e, neg * e)
            e = e + adj_bias
            m = jnp.max(e, axis=-1, keepdims=True)           # [TM, 1] (XLU)
            p = jnp.exp(e - m).astype(jnp.bfloat16)          # masked entries underflow to 0
            # aggregation + softmax denominator in ONE MXU pass (bf16 in, f32 accum);
            # column HD of z_aug is all-ones -> agg[:, HD] == sum_u p[v, u]
            agg = jnp.dot(p, zaug_ref[h],
                          preferred_element_type=jnp.float32)           # [TM, W]
            inv = pl.reciprocal(agg[:, HD:HD + 1], approx=True)         # [TM, 1], EUP
            part = agg * inv                                            # head h in its own cols
            acc = part if acc is None else acc + part
        out_ref[...] = acc + bias_ref[...]                   # single lane-dense store

    return kernel


def _chip_info():
    kind = ""
    try:
        kind = jax.devices()[0].device_kind.lower()
    except Exception:
        pass
    try:
        vmem_cap = int(pltpu.get_tpu_info().vmem_capacity_bytes)
    except Exception:
        vmem_cap = 64 * 1024 * 1024        # conservative per-TC floor (v7x)
    two_cores = "v7" in kind               # v7x: 2 TensorCores share the ("parallel",) grid
    bf16_vpu = ("v6" in kind) or ("v7" in kind)   # bf16 VPU/EUP; v5e and older stay f32
    return vmem_cap, two_cores, bf16_vpu


def _pick_tiling(N, H, W, use_bf16, vmem_cap, two_cores, tm_override=None):
    cdt_bytes = 2 if use_bf16 else 4
    n8 = _round_up(max(N, 8), 8)
    # Grid-invariant blocks (the pipeline double-buffers every input block).
    resident = 2 * (H * N * W * 2          # z_aug (bf16)
                    + H * N * 4            # el (f32)
                    + W * 4)               # bias
    resident += 1 << 20                    # headroom
    # Bytes per destination row of the tile.
    per_row = (2 * N * 2                   # adj_bias block (bf16, double-buffered)
               + 2 * H * 4                 # er block
               + 2 * W * 4                 # output block
               + H * N * (2 * cdt_bytes + 2)   # live e / (e - m) / p temporaries
               + H * W * 4                 # agg / acc (f32)
               + W * 8)                    # epilogue temps
    budget = int(0.70 * vmem_cap)
    avail = budget - resident
    tm_fit = max(8, min(avail // per_row if avail > 0 else 8, 1024))
    tm_fit = (int(tm_fit) // 8) * 8

    if tm_override is not None:
        tm = min(_round_up(tm_override, 8), n8)
    elif two_cores:
        # keep at least 2 row tiles so both TensorCores get work
        tm = max(8, min(tm_fit, _round_up(-(-N // 2), 8)))
    else:
        # single TensorCore: largest tile that fits -> fewest grid steps
        tm = max(8, min(tm_fit, n8))

    est = resident + tm * per_row
    vmem_limit = int(min(int(0.92 * vmem_cap), max(8 << 20, int(1.3 * est))))
    return int(tm), vmem_limit


def gat_model_forward(node_weight, adj, params, num_heads, out_feats, *,
                      tm_override=None, force_bf16=None):
    """node_weight: [N] f32, adj: [N, N] f32 with adj[u, v] = 1 iff edge u -> v."""
    N = node_weight.shape[0]
    H, D = num_heads, out_feats
    HD = H * D
    f32 = jnp.float32

    vmem_cap, two_cores, bf16_vpu = _chip_info()
    use_bf16 = bf16_vpu if force_bf16 is None else bool(force_bf16)

    # --- fused XLA precompute (rank-1 feature path, fc projection, attention logits) ---
    w = node_weight.reshape(N, 1).astype(f32)
    feat = w @ params["lin_w"] + params["lin_b"]                        # [N, F]
    z = (feat @ params["fc_w"]).reshape(N, H, D)                        # [N, H, D]
    el = jnp.einsum("nhd,hd->hn", z, params["attn_l"])                  # [H, N]  source side
    er = jnp.einsum("nhd,hd->nh", z, params["attn_r"])                  # [N, H]  destination side

    # additive softmax mask (dgl.add_self_loop folded in), produced in one fused pass, bf16
    eye = jnp.eye(N, dtype=f32)
    adj_bias = jnp.where(adj.astype(f32).T + eye > 0, 0.0, -1e30).astype(jnp.bfloat16)

    # augmented, head-major features: head h in cols [h*D:(h+1)*D], ones-column at col HD
    W_out = _round_up(HD + 1, 128)                                      # lane-dense output width
    z_heads = jnp.transpose(z, (1, 0, 2))                               # [H, N, D]
    z_aug = jnp.zeros((H, N, W_out), f32)
    for h in range(H):
        z_aug = z_aug.at[h, :, h * D:(h + 1) * D].set(z_heads[h])
    z_aug = z_aug.at[:, :, HD].set(1.0).astype(jnp.bfloat16)            # [H, N, W_out]

    bias_pad = jnp.zeros((1, W_out), f32).at[:, :HD].set(params["bias"])

    TM, vmem_limit = _pick_tiling(N, H, W_out, use_bf16, vmem_cap, two_cores, tm_override)
    grid = (pl.cdiv(N, TM),)

    out = pl.pallas_call(
        make_gat_kernel(H, D, W_out, use_bf16),
        out_shape=jax.ShapeDtypeStruct((N, W_out), f32),
        grid=grid,
        in_specs=[
            pl.BlockSpec((TM, N), lambda i: (i, 0)),              # adj_bias: tiled over dst rows
            pl.BlockSpec((H, N), lambda i: (0, 0)),               # el: resident
            pl.BlockSpec((TM, H), lambda i: (i, 0)),              # er: tiled over dst rows
            pl.BlockSpec((H, N, W_out), lambda i: (0, 0, 0)),     # z_aug: resident
            pl.BlockSpec((1, W_out), lambda i: (0, 0)),           # bias: resident
        ],
        out_specs=pl.BlockSpec((TM, W_out), lambda i: (i, 0)),
        compiler_params=pltpu.CompilerParams(
            dimension_semantics=("parallel",),
            vmem_limit_bytes=vmem_limit),
    )(adj_bias, el, er, z_aug, bias_pad)

    return out[:, :HD].reshape(N, H, D)


def reference_forward(node_weight, adj, params, H, D):
    """Pure-JAX f32 reference of the same forward pass."""
    N = node_weight.shape[0]
    adj_sl = jnp.maximum(adj, jnp.eye(N, dtype=adj.dtype))
    feat = node_weight.reshape(N, 1) @ params["lin_w"] + params["lin_b"]   # [N, F]
    z = (feat @ params["fc_w"]).reshape(N, H, D)                           # [N, H, D]
    el = jnp.sum(z * params["attn_l"][None], axis=-1)                      # [N, H]
    er = jnp.sum(z * params["attn_r"][None], axis=-1)                      # [N, H]
    e = el[:, None, :] + er[None, :, :]                                    # e[u, v, h]
    e = jnp.where(e > 0, e, NEG_SLOPE * e)
    mask = adj_sl[:, :, None] > 0
    e = jnp.where(mask, e, -1e30)
    e_max = jnp.max(e, axis=0, keepdims=True)
    p = jnp.where(mask, jnp.exp(e - e_max), 0.0)
    a = p / jnp.sum(p, axis=0, keepdims=True)                              # softmax over src u
    rst = jnp.einsum("uvh,uhd->vhd", a, z)
    return rst + params["bias"].reshape(1, H, D)


def init_params(key, in_feats, out_feats, num_heads):
    H, D = num_heads, out_feats
    k1, k2, k3, k4, k5 = jax.random.split(key, 5)
    gain = float(np.sqrt(2.0))  # calculate_gain('relu')

    def xavier(k, shape, fan_in, fan_out):
        std = gain * np.sqrt(2.0 / (fan_in + fan_out))
        return jax.random.normal(k, shape, dtype=jnp.float32) * std

    return {
        # nn.Linear(1, in_feats): deterministic stand-in for PyTorch default init
        "lin_w": jax.random.normal(k1, (1, in_feats), dtype=jnp.float32) * 0.5,
        "lin_b": jax.random.normal(k2, (1, in_feats), dtype=jnp.float32) * 0.1,
        # GATConv.fc: xavier_normal_(gain=relu), stored transposed [F, H*D]
        "fc_w": xavier(k3, (in_feats, H * D), in_feats, H * D),
        # attn_l / attn_r: xavier_normal_ on (1, H, D) -> stored as [H, D]
        "attn_l": xavier(k4, (H, D), D, H),
        "attn_r": xavier(k5, (H, D), D, H),
        # explicit bias initialized to 0 by GATConv.reset_parameters (kept general here)
        "bias": jnp.zeros((1, H * D), dtype=jnp.float32),
    }


if __name__ == "__main__":
    N, in_feats, out_feats, num_heads = 128, 16, 32, 2

    key = jax.random.PRNGKey(0)
    k_w, k_adj, k_p = jax.random.split(key, 3)

    node_weight = jax.random.normal(k_w, (N,), dtype=jnp.float32)          # graph.ndata['weight']
    adj = (jax.random.uniform(k_adj, (N, N)) < 0.1).astype(jnp.float32)    # dense edge set u -> v
    adj = adj * (1.0 - jnp.eye(N, dtype=jnp.float32))                      # self loops added inside
    params = init_params(k_p, in_feats, out_feats, num_heads)

    ref = reference_forward(node_weight, adj, params, num_heads, out_feats)

    # 1) Auto-tuned config (chip-aware TM / vmem budget / compute dtype).
    out = gat_model_forward(node_weight, adj, params, num_heads, out_feats)
    out = jax.block_until_ready(out)
    assert out.shape == (N, num_heads, out_feats)
    np.testing.assert_allclose(np.asarray(out), np.asarray(ref), rtol=4e-2, atol=4e-2)

    # 2) Forced f32 softmax path + small tile -> exercises the row-tiled pipeline (grid > 1).
    out_f32 = gat_model_forward(node_weight, adj, params, num_heads, out_feats,
                                tm_override=32, force_bf16=False)
    out_f32 = jax.block_until_ready(out_f32)
    np.testing.assert_allclose(np.asarray(out_f32), np.asarray(ref), rtol=2e-2, atol=2e-2)

    # 3) Forced bf16 softmax path (the v6e/v7x fast path); bf16 edge-softmax + approx
    #    reciprocal -> ~1e-2-level error vs the f32 reference.
    out_bf16 = gat_model_forward(node_weight, adj, params, num_heads, out_feats,
                                 tm_override=64, force_bf16=True)
    out_bf16 = jax.block_until_ready(out_bf16)
    np.testing.assert_allclose(np.asarray(out_bf16), np.asarray(ref), rtol=4e-2, atol=4e-2)

    print("KERNEL_OK")
</pallas_src>

<mosaic_0001>
module attributes {stable_mosaic.version = 11 : i64} {
  func.func @kernel(%arg0: i32, %arg1: memref<128x128xbf16, #tpu.memory_space<vmem>>, %arg2: memref<2x128xf32, #tpu.memory_space<vmem>>, %arg3: memref<128x2xf32, #tpu.memory_space<vmem>>, %arg4: memref<2x128x128xbf16, #tpu.memory_space<vmem>>, %arg5: memref<1x128xf32, #tpu.memory_space<vmem>>, %arg6: memref<128x128xf32, #tpu.memory_space<vmem>>) attributes {dimension_semantics = [#tpu.dimension_semantics<parallel>], iteration_bounds = array<i64: 1>, scalar_prefetch = 0 : i64, scratch_operands = 0 : i64, tpu.core_type = #tpu.core_type<tc>, window_params = [{transform_indices = @transform_0, window_bounds = array<i64: 128, 128>}, {pipeline_mode = #tpu.pipeline_mode<synchronous>, transform_indices = @transform_1, window_bounds = array<i64: 2, 128>}, {transform_indices = @transform_2, window_bounds = array<i64: 128, 2>}, {pipeline_mode = #tpu.pipeline_mode<synchronous>, transform_indices = @transform_3, window_bounds = array<i64: 2, 128, 128>}, {pipeline_mode = #tpu.pipeline_mode<synchronous>, transform_indices = @transform_4, window_bounds = array<i64: 1, 128>}, {transform_indices = @transform_5, window_bounds = array<i64: 128, 128>}]} {
    %c0 = arith.constant 0 : index
    %c0_0 = arith.constant 0 : index
    %0 = vector.load %arg1[%c0, %c0_0] : memref<128x128xbf16, #tpu.memory_space<vmem>>, vector<128x128xbf16>
    %1 = arith.extf %0 : vector<128x128xbf16> to vector<128x128xf32>
    %c0_1 = arith.constant 0 : index
    %c0_2 = arith.constant 0 : index
    %2 = vector.load %arg2[%c0_1, %c0_2] : memref<2x128xf32, #tpu.memory_space<vmem>>, vector<2x128xf32>
    %c0_3 = arith.constant 0 : index
    %c0_4 = arith.constant 0 : index
    %3 = vector.load %arg3[%c0_3, %c0_4] : memref<128x2xf32, #tpu.memory_space<vmem>>, vector<128x2xf32>
    %4 = vector.extract_strided_slice %3 {offsets = [0, 0], sizes = [128, 1], strides = [1, 1]} : vector<128x2xf32> to vector<128x1xf32>
    %5 = vector.extract_strided_slice %2 {offsets = [0, 0], sizes = [1, 128], strides = [1, 1]} : vector<2x128xf32> to vector<1x128xf32>
    %6 = vector.broadcast %4 : vector<128x1xf32> to vector<128x128xf32>
    %7 = vector.broadcast %5 : vector<1x128xf32> to vector<128x128xf32>
    %8 = arith.addf %6, %7 : vector<128x128xf32>
    %cst = arith.constant 0.000000e+00 : f32
    %9 = vector.broadcast %cst : f32 to vector<128x128xf32>
    %10 = arith.cmpf ogt, %8, %9 : vector<128x128xf32>
    %cst_5 = arith.constant 2.000000e-01 : f32
    %11 = vector.broadcast %cst_5 : f32 to vector<128x128xf32>
    %12 = arith.mulf %11, %8 : vector<128x128xf32>
    %13 = arith.select %10, %8, %12 : vector<128x128xi1>, vector<128x128xf32>
    %14 = arith.addf %13, %1 : vector<128x128xf32>
    %cst_6 = arith.constant dense<0xFF800000> : vector<128xf32>
    %15 = vector.multi_reduction <maximumf>, %14, %cst_6 [1] : vector<128x128xf32> to vector<128xf32>
    %16 = vector.shape_cast %15 : vector<128xf32> to vector<128x1xf32>
    %17 = vector.broadcast %16 : vector<128x1xf32> to vector<128x128xf32>
    %18 = arith.subf %14, %17 : vector<128x128xf32>
    %19 = math.exp %18 : vector<128x128xf32>
    %20 = arith.truncf %19 : vector<128x128xf32> to vector<128x128xbf16>
    %c0_7 = arith.constant 0 : index
    %c0_8 = arith.constant 0 : index
    %c0_9 = arith.constant 0 : index
    %21 = vector.load %arg4[%c0_7, %c0_8, %c0_9] : memref<2x128x128xbf16, #tpu.memory_space<vmem>>, vector<1x128x128xbf16>
    %22 = vector.shape_cast %21 : vector<1x128x128xbf16> to vector<128x128xbf16>
    %cst_10 = arith.constant dense<0.000000e+00> : vector<128x128xf32>
    %23 = tpu.matmul %20, %22, %cst_10 {dimension_numbers = #tpu.dot_dimension_numbers<[1], [0], [0], [1], [0, 0, 1, 1], [], []>} : vector<128x128xbf16>, vector<128x128xbf16>, vector<128x128xf32> -> vector<128x128xf32>
    %24 = vector.extract_strided_slice %23 {offsets = [0, 64], sizes = [128, 1], strides = [1, 1]} : vector<128x128xf32> to vector<128x1xf32>
    %25 = tpu.reciprocal %24 {approx = true} : vector<128x1xf32> -> vector<128x1xf32>
    %26 = vector.broadcast %25 : vector<128x1xf32> to vector<128x128xf32>
    %27 = arith.mulf %23, %26 : vector<128x128xf32>
    %28 = vector.extract_strided_slice %3 {offsets = [0, 1], sizes = [128, 1], strides = [1, 1]} : vector<128x2xf32> to vector<128x1xf32>
    %29 = vector.extract_strided_slice %2 {offsets = [1, 0], sizes = [1, 128], strides = [1, 1]} : vector<2x128xf32> to vector<1x128xf32>
    %30 = vector.broadcast %28 : vector<128x1xf32> to vector<128x128xf32>
    %31 = vector.broadcast %29 : vector<1x128xf32> to vector<128x128xf32>
    %32 = arith.addf %30, %31 : vector<128x128xf32>
    %cst_11 = arith.constant 0.000000e+00 : f32
    %33 = vector.broadcast %cst_11 : f32 to vector<128x128xf32>
    %34 = arith.cmpf ogt, %32, %33 : vector<128x128xf32>
    %cst_12 = arith.constant 2.000000e-01 : f32
    %35 = vector.broadcast %cst_12 : f32 to vector<128x128xf32>
    %36 = arith.mulf %35, %32 : vector<128x128xf32>
    %37 = arith.select %34, %32, %36 : vector<128x128xi1>, vector<128x128xf32>
    %38 = arith.addf %37, %1 : vector<128x128xf32>
    %cst_13 = arith.constant dense<0xFF800000> : vector<128xf32>
    %39 = vector.multi_reduction <maximumf>, %38, %cst_13 [1] : vector<128x128xf32> to vector<128xf32>
    %40 = vector.shape_cast %39 : vector<128xf32> to vector<128x1xf32>
    %41 = vector.broadcast %40 : vector<128x1xf32> to vector<128x128xf32>
    %42 = arith.subf %38, %41 : vector<128x128xf32>
    %43 = math.exp %42 : vector<128x128xf32>
    %44 = arith.truncf %43 : vector<128x128xf32> to vector<128x128xbf16>
    %c1 = arith.constant 1 : index
    %c0_14 = arith.constant 0 : index
    %c0_15 = arith.constant 0 : index
    %45 = vector.load %arg4[%c1, %c0_14, %c0_15] : memref<2x128x128xbf16, #tpu.memory_space<vmem>>, vector<1x128x128xbf16>
    %46 = vector.shape_cast %45 : vector<1x128x128xbf16> to vector<128x128xbf16>
    %cst_16 = arith.constant dense<0.000000e+00> : vector<128x128xf32>
    %47 = tpu.matmul %44, %46, %cst_16 {dimension_numbers = #tpu.dot_dimension_numbers<[1], [0], [0], [1], [0, 0, 1, 1], [], []>} : vector<128x128xbf16>, vector<128x128xbf16>, vector<128x128xf32> -> vector<128x128xf32>
    %48 = vector.extract_strided_slice %47 {offsets = [0, 64], sizes = [128, 1], strides = [1, 1]} : vector<128x128xf32> to vector<128x1xf32>
    %49 = tpu.reciprocal %48 {approx = true} : vector<128x1xf32> -> vector<128x1xf32>
    %50 = vector.broadcast %49 : vector<128x1xf32> to vector<128x128xf32>
    %51 = arith.mulf %47, %50 : vector<128x128xf32>
    %52 = arith.addf %27, %51 : vector<128x128xf32>
    %c0_17 = arith.constant 0 : index
    %c0_18 = arith.constant 0 : index
    %53 = vector.load %arg5[%c0_17, %c0_18] : memref<1x128xf32, #tpu.memory_space<vmem>>, vector<1x128xf32>
    %54 = vector.broadcast %53 : vector<1x128xf32> to vector<128x128xf32>
    %55 = arith.addf %52, %54 : vector<128x128xf32>
    %c0_19 = arith.constant 0 : index
    %c0_20 = arith.constant 0 : index
    %56 = vector.load %arg6[%c0_19, %c0_20] : memref<128x128xf32, #tpu.memory_space<vmem>>, vector<128x128xf32>
    tpu.vector_store %arg6[%c0_19, %c0_20], %55 {strides = array<i32>} : memref<128x128xf32, #tpu.memory_space<vmem>>, vector<128x128xf32>,
    return
  }
  func.func @transform_0(%arg0: i32) -> (i32, i32) {
    %c0_i32 = arith.constant 0 : i32
    %c0_i32_0 = arith.constant 0 : i32
    return %arg0, %c0_i32 : i32, i32
  }
  func.func @transform_1(%arg0: i32) -> (i32, i32) {
    %c0_i32 = arith.constant 0 : i32
    %c0_i32_0 = arith.constant 0 : i32
    %c0_i32_1 = arith.constant 0 : i32
    return %c0_i32, %c0_i32_0 : i32, i32
  }
  func.func @transform_2(%arg0: i32) -> (i32, i32) {
    %c0_i32 = arith.constant 0 : i32
    %c0_i32_0 = arith.constant 0 : i32
    return %arg0, %c0_i32 : i32, i32
  }
  func.func @transform_3(%arg0: i32) -> (i32, i32, i32) {
    %c0_i32 = arith.constant 0 : i32
    %c0_i32_0 = arith.constant 0 : i32
    %c0_i32_1 = arith.constant 0 : i32
    %c0_i32_2 = arith.constant 0 : i32
    return %c0_i32, %c0_i32_0, %c0_i32_1 : i32, i32, i32
  }
  func.func @transform_4(%arg0: i32) -> (i32, i32) {
    %c0_i32 = arith.constant 0 : i32
    %c0_i32_0 = arith.constant 0 : i32
    %c0_i32_1 = arith.constant 0 : i32
    return %c0_i32, %c0_i32_0 : i32, i32
  }
  func.func @transform_5(%arg0: i32) -> (i32, i32) {
    %c0_i32 = arith.constant 0 : i32
    %c0_i32_0 = arith.constant 0 : i32
    return %arg0, %c0_i32 : i32, i32
  }
}

</mosaic_0001>

<llo_original>
// kernel: tpu_custom_call.1
$region0: #{tpu_custom_call.1}
  #allocation0 [shape = 'u32[]', space=smem, size = 0x4, offset = 0x4, fixed_abs, tag = 'smem constant byte address 0x4 - core index']
  #allocation1 [shape = 'u32[72,128]{1,0:T(1,128)}', space=vmem, size = 0x9000, scoped, tag = 'internal scratch']
  %s0 = inlined_call_operand.hbm [shape: bf16[128,128], index: 0, kind: input, shape index: {}]
  %s1 = inlined_call_operand.vmem [shape: f32[2,128], index: 1, kind: input, shape index: {}]
  %s2 = inlined_call_operand.vmem [shape: f32[128,2], index: 2, kind: input, shape index: {}]
  %s3 = inlined_call_operand.vmem [shape: bf16[2,128,128], index: 3, kind: input, shape index: {}]
  %s4 = inlined_call_operand.vmem [shape: f32[1,128], index: 4, kind: input, shape index: {}]
  %s5 = inlined_call_operand.hbm [shape: f32[128,128], index: 5, kind: output, shape index: {}]
  %s6 = sld [smem:[#allocation0]]
  $region34: #{tpu_custom_call.1} parent=0
    _
  %s8 = ssub.s32 1, %s6
  %s9 = scalar_select 0, %s8, %s6
  $region1: #{tpu_custom_call.1} parent=0
    #allocation2 [shape = 'u8[32768]{0}', space=vmem, size = 0x8000, scoped, tag = 'input window, operand 0, single buffered']
    #allocation3 [shape = 's32[1]{0}', space=sflag, size = 0x4, scoped, tag = 'scoped memory for tpu_custom_call.1']
    #allocation4 [shape = 's32[1]{0}', space=sflag, size = 0x4, scoped, tag = 'scoped memory for tpu_custom_call.1']
    #allocation5 [shape = 'u8[65536]{0}', space=vmem, size = 0x10000, scoped, tag = 'output window, operand 0, single buffered']
    %10 = vsyncpa [#allocation3], 0
    %11 = vsyncpa [#allocation4], 0
    // Predicated region
    $region2: #{tpu_custom_call.1} parent=1 // pred_check
      _
    $region3: #{tpu_custom_call.1} parent=1 // pred_check_branch
      %13 = sbr.rel (0) target = $region5
    $region4: #{tpu_custom_call.1} parent=1 // pred_region
      %15 = vsyncadd [#allocation3], 0
      %s16 = sshll.u32 %s0, 4
      %s17 = int_to_ptr.hbm [resolvable:$true] %s16
      %s18 = sshll.u32 [#allocation2], 4
      %s19 = int_to_ptr.vmem [resolvable:$true] %s18
      %24 = dma.hbm_to_vmem [thread:$0]  %s17, 1024, %s19, [#allocation3], 64, 64, 4
    $region5: #{tpu_custom_call.1} parent=1 // pred_fallthru
      _
    // Predicated region
    $region6: #{tpu_custom_call.1} parent=1 // pred_check
      _
    $region7: #{tpu_custom_call.1} parent=1 // pred_check_branch
      %26 = sbr.rel (0) target = $region9
    $region8: #{tpu_custom_call.1} parent=1 // pred_region
      _
    $region9: #{tpu_custom_call.1} parent=1 // pred_fallthru
      _
    // Predicated region
    $region10: #{tpu_custom_call.1} parent=1 // pred_check
      _
    $region11: #{tpu_custom_call.1} parent=1 // pred_check_branch
      %28 = sbr.rel (0) target = $region13
    $region12: #{tpu_custom_call.1} parent=1 // pred_region
      _
    $region13: #{tpu_custom_call.1} parent=1 // pred_fallthru
      _
    // Predicated region
    $region14: #{tpu_custom_call.1} parent=1 // pred_check
      _
    $region15: #{tpu_custom_call.1} parent=1 // pred_check_branch
      %30 = sbr.rel (0) target = $region17
    $region16: #{tpu_custom_call.1} parent=1 // pred_region
      _
    $region17: #{tpu_custom_call.1} parent=1 // pred_fallthru
      _
    // Predicated region
    $region18: #{tpu_custom_call.1} parent=1 // pred_check
      _
    $region19: #{tpu_custom_call.1} parent=1 // pred_check_branch
      %32 = sbr.rel (0) target = $region21
    $region20: #{tpu_custom_call.1} parent=1 // pred_region
      _
    $region21: #{tpu_custom_call.1} parent=1 // pred_fallthru
      _
    // Predicated region
    $region22: #{tpu_custom_call.1} parent=1 // pred_check
      _
    $region23: #{tpu_custom_call.1} parent=1 // pred_check_branch
      %34 = sbr.rel (0) target = $region25
    $region24: #{tpu_custom_call.1} parent=1 // pred_region
      %36 = dma.done [#allocation3], 1024
    $region25: #{tpu_custom_call.1} parent=1 // pred_fallthru
      _
    %v37 = vld [vmem:[#allocation2] sm:$0xf]
    %v38 = vld [vmem:[#allocation2 + $0x4] sm:$0xf]
    %v39 = vld [vmem:[#allocation2 + $0x8] sm:$0xf]
    %v40 = vld [vmem:[#allocation2 + $0xc] sm:$0xf]
    %v41 = vld [vmem:[#allocation2 + $0x10] sm:$0xf]
    %v42 = vld [vmem:[#allocation2 + $0x14] sm:$0xf]
    %v43 = vld [vmem:[#allocation2 + $0x18] sm:$0xf]
    %v44 = vld [vmem:[#allocation2 + $0x1c] sm:$0xf]
    %v45 = vld [vmem:[#allocation2 + $0x20] sm:$0xf]
    %v46 = vld [vmem:[#allocation2 + $0x24] sm:$0xf]
    %v47 = vld [vmem:[#allocation2 + $0x28] sm:$0xf]
    %v48 = vld [vmem:[#allocation2 + $0x2c] sm:$0xf]
    %v49 = vld [vmem:[#allocation2 + $0x30] sm:$0xf]
    %v50 = vld [vmem:[#allocation2 + $0x34] sm:$0xf]
    %v51 = vld [vmem:[#allocation2 + $0x38] sm:$0xf]
    %v52 = vld [vmem:[#allocation2 + $0x3c] sm:$0xf]
    %v53 = vunpack.c.l.bf16 %v37
    %v54 = vunpack.c.l.bf16 %v38
    %v55 = vunpack.c.l.bf16 %v39
    %v56 = vunpack.c.l.bf16 %v40
    %v57 = vunpack.c.l.bf16 %v41
    %v58 = vunpack.c.l.bf16 %v42
    %v59 = vunpack.c.l.bf16 %v43
    %v60 = vunpack.c.l.bf16 %v44
    %v61 = vunpack.c.l.bf16 %v45
    %v62 = vunpack.c.l.bf16 %v46
    %v63 = vunpack.c.l.bf16 %v47
    %v64 = vunpack.c.l.bf16 %v48
    %v65 = vunpack.c.l.bf16 %v49
    %v66 = vunpack.c.l.bf16 %v50
    %v67 = vunpack.c.l.bf16 %v51
    %v68 = vunpack.c.l.bf16 %v52
    %v69 = vld [vmem:[%s1] sm:$0x3]
    %v70 = vld [vmem:[%s2] sm:$0xff]
    %v71 = vld [vmem:[%s2 + $0x8] sm:$0xff]
    %v72 = vld [vmem:[%s2 + $0x10] sm:$0xff]
    %v73 = vld [vmem:[%s2 + $0x18] sm:$0xff]
    %v74 = vld [vmem:[%s2 + $0x20] sm:$0xff]
    %v75 = vld [vmem:[%s2 + $0x28] sm:$0xff]
    %v76 = vld [vmem:[%s2 + $0x30] sm:$0xff]
    %v77 = vld [vmem:[%s2 + $0x38] sm:$0xff]
    %v78 = vld [vmem:[%s2 + $0x40] sm:$0xff]
    %v79 = vld [vmem:[%s2 + $0x48] sm:$0xff]
    %v80 = vld [vmem:[%s2 + $0x50] sm:$0xff]
    %v81 = vld [vmem:[%s2 + $0x58] sm:$0xff]
    %v82 = vld [vmem:[%s2 + $0x60] sm:$0xff]
    %v83 = vld [vmem:[%s2 + $0x68] sm:$0xff]
    %v84 = vld [vmem:[%s2 + $0x70] sm:$0xff]
    %v85 = vld [vmem:[%s2 + $0x78] sm:$0xff]
    %87 = vset.pattern.permute.xlu0 0
    %88 = vperm.xlu0 %87, %v70
    %v89 = vpop.permute.xlu0 %88
    %92 = vset.pattern.permute.xlu0 0
    %93 = vperm.xlu0 %92, %v71
    %v94 = vpop.permute.xlu0 %93
    %97 = vset.pattern.permute.xlu0 0
    %98 = vperm.xlu0 %97, %v72
    %v99 = vpop.permute.xlu0 %98
    %102 = vset.pattern.permute.xlu0 0
    %103 = vperm.xlu0 %102, %v73
    %v104 = vpop.permute.xlu0 %103
    %107 = vset.pattern.permute.xlu0 0
    %108 = vperm.xlu0 %107, %v74
    %v109 = vpop.permute.xlu0 %108
    %112 = vset.pattern.permute.xlu0 0
    %113 = vperm.xlu0 %112, %v75
    %v114 = vpop.permute.xlu0 %113
    %117 = vset.pattern.permute.xlu0 0
    %118 = vperm.xlu0 %117, %v76
    %v119 = vpop.permute.xlu0 %118
    %122 = vset.pattern.permute.xlu0 0
    %123 = vperm.xlu0 %122, %v77
    %v124 = vpop.permute.xlu0 %123
    %127 = vset.pattern.permute.xlu0 0
    %128 = vperm.xlu0 %127, %v78
    %v129 = vpop.permute.xlu0 %128
    %132 = vset.pattern.permute.xlu0 0
    %133 = vperm.xlu0 %132, %v79
    %v134 = vpop.permute.xlu0 %133
    %137 = vset.pattern.permute.xlu0 0
    %138 = vperm.xlu0 %137, %v80
    %v139 = vpop.permute.xlu0 %138
    %142 = vset.pattern.permute.xlu0 0
    %143 = vperm.xlu0 %142, %v81
    %v144 = vpop.permute.xlu0 %143
    %147 = vset.pattern.permute.xlu0 0
    %148 = vperm.xlu0 %147, %v82
    %v149 = vpop.permute.xlu0 %148
    %152 = vset.pattern.permute.xlu0 0
    %153 = vperm.xlu0 %152, %v83
    %v154 = vpop.permute.xlu0 %153
    %157 = vset.pattern.permute.xlu0 0
    %158 = vperm.xlu0 %157, %v84
    %v159 = vpop.permute.xlu0 %158
    %162 = vset.pattern.permute.xlu0 0
    %163 = vperm.xlu0 %162, %v85
    %v164 = vpop.permute.xlu0 %163
    %v166 = vperm.slane %v69, 0
    %v167 = vadd.f32 %v89, %v166
    %v168 = vadd.f32 %v94, %v166
    %v169 = vadd.f32 %v99, %v166
    %v170 = vadd.f32 %v104, %v166
    %v171 = vadd.f32 %v109, %v166
    %v172 = vadd.f32 %v114, %v166
    %v173 = vadd.f32 %v119, %v166
    %v174 = vadd.f32 %v124, %v166
    %v175 = vadd.f32 %v129, %v166
    %v176 = vadd.f32 %v134, %v166
    %v177 = vadd.f32 %v139, %v166
    %v178 = vadd.f32 %v144, %v166
    %v179 = vadd.f32 %v149, %v166
    %v180 = vadd.f32 %v154, %v166
    %v181 = vadd.f32 %v159, %v166
    %v182 = vadd.f32 %v164, %v166
    %vm183 = vcmp.gt.f32.partialorder %v167, 0.0
    %vm184 = vcmp.gt.f32.partialorder %v168, 0.0
    %vm185 = vcmp.gt.f32.partialorder %v169, 0.0
    %vm186 = vcmp.gt.f32.partialorder %v170, 0.0
    %vm187 = vcmp.gt.f32.partialorder %v171, 0.0
    %vm188 = vcmp.gt.f32.partialorder %v172, 0.0
    %vm189 = vcmp.gt.f32.partialorder %v173, 0.0
    %vm190 = vcmp.gt.f32.partialorder %v174, 0.0
    %vm191 = vcmp.gt.f32.partialorder %v175, 0.0
    %vm192 = vcmp.gt.f32.partialorder %v176, 0.0
    %vm193 = vcmp.gt.f32.partialorder %v177, 0.0
    %vm194 = vcmp.gt.f32.partialorder %v178, 0.0
    %vm195 = vcmp.gt.f32.partialorder %v179, 0.0
    %vm196 = vcmp.gt.f32.partialorder %v180, 0.0
    %vm197 = vcmp.gt.f32.partialorder %v181, 0.0
    %vm198 = vcmp.gt.f32.partialorder %v182, 0.0
    %v199 = vmul.f32 %v167, 0.2
    %v200 = vmul.f32 %v168, 0.2
    %v201 = vmul.f32 %v169, 0.2
    %v202 = vmul.f32 %v170, 0.2
    %v203 = vmul.f32 %v171, 0.2
    %v204 = vmul.f32 %v172, 0.2
    %v205 = vmul.f32 %v173, 0.2
    %v206 = vmul.f32 %v174, 0.2
    %v207 = vmul.f32 %v175, 0.2
    %v208 = vmul.f32 %v176, 0.2
    %v209 = vmul.f32 %v177, 0.2
    %v210 = vmul.f32 %v178, 0.2
    %v211 = vmul.f32 %v179, 0.2
    %v212 = vmul.f32 %v180, 0.2
    %v213 = vmul.f32 %v181, 0.2
    %v214 = vmul.f32 %v182, 0.2
    %v215 = vsel %vm183, %v167, %v199
    %v216 = vsel %vm184, %v168, %v200
    %v217 = vsel %vm185, %v169, %v201
    %v218 = vsel %vm186, %v170, %v202
    %v219 = vsel %vm187, %v171, %v203
    %v220 = vsel %vm188, %v172, %v204
    %v221 = vsel %vm189, %v173, %v205
    %v222 = vsel %vm190, %v174, %v206
    %v223 = vsel %vm191, %v175, %v207
    %v224 = vsel %vm192, %v176, %v208
    %v225 = vsel %vm193, %v177, %v209
    %v226 = vsel %vm194, %v178, %v210
    %v227 = vsel %vm195, %v179, %v211
    %v228 = vsel %vm196, %v180, %v212
    %v229 = vsel %vm197, %v181, %v213
    %v230 = vsel %vm198, %v182, %v214
    %v231 = vadd.f32 %v215, %v53
    %v232 = vadd.f32 %v216, %v54
    %v233 = vadd.f32 %v217, %v55
    %v234 = vadd.f32 %v218, %v56
    %v235 = vadd.f32 %v219, %v57
    %v236 = vadd.f32 %v220, %v58
    %v237 = vadd.f32 %v221, %v59
    %v238 = vadd.f32 %v222, %v60
    %v239 = vadd.f32 %v223, %v61
    %v240 = vadd.f32 %v224, %v62
    %v241 = vadd.f32 %v225, %v63
    %v242 = vadd.f32 %v226, %v64
    %v243 = vadd.f32 %v227, %v65
    %v244 = vadd.f32 %v228, %v66
    %v245 = vadd.f32 %v229, %v67
    %v246 = vadd.f32 %v230, %v68
    %247 = vmax.xlane.f32.xlu0 %v231
    %v248 = vpop.xlane.xlu0 %247
    %249 = vmax.xlane.f32.xlu0 %v232
    %v250 = vpop.xlane.xlu0 %249
    %251 = vmax.xlane.f32.xlu0 %v233
    %v252 = vpop.xlane.xlu0 %251
    %253 = vmax.xlane.f32.xlu0 %v234
    %v254 = vpop.xlane.xlu0 %253
    %255 = vmax.xlane.f32.xlu0 %v235
    %v256 = vpop.xlane.xlu0 %255
    %257 = vmax.xlane.f32.xlu0 %v236
    %v258 = vpop.xlane.xlu0 %257
    %259 = vmax.xlane.f32.xlu0 %v237
    %v260 = vpop.xlane.xlu0 %259
    %261 = vmax.xlane.f32.xlu0 %v238
    %v262 = vpop.xlane.xlu0 %261
    %263 = vmax.xlane.f32.xlu0 %v239
    %v264 = vpop.xlane.xlu0 %263
    %265 = vmax.xlane.f32.xlu0 %v240
    %v266 = vpop.xlane.xlu0 %265
    %267 = vmax.xlane.f32.xlu0 %v241
    %v268 = vpop.xlane.xlu0 %267
    %269 = vmax.xlane.f32.xlu0 %v242
    %v270 = vpop.xlane.xlu0 %269
    %271 = vmax.xlane.f32.xlu0 %v243
    %v272 = vpop.xlane.xlu0 %271
    %273 = vmax.xlane.f32.xlu0 %v244
    %v274 = vpop.xlane.xlu0 %273
    %275 = vmax.xlane.f32.xlu0 %v245
    %v276 = vpop.xlane.xlu0 %275
    %277 = vmax.xlane.f32.xlu0 %v246
    %v278 = vpop.xlane.xlu0 %277
    %v279 = vsub.f32 %v231, %v248
    %v280 = vsub.f32 %v232, %v250
    %v281 = vsub.f32 %v233, %v252
    %v282 = vsub.f32 %v234, %v254
    %v283 = vsub.f32 %v235, %v256
    %v284 = vsub.f32 %v236, %v258
    %v285 = vsub.f32 %v237, %v260
    %v286 = vsub.f32 %v238, %v262
    %v287 = vsub.f32 %v239, %v264
    %v288 = vsub.f32 %v240, %v266
    %v289 = vsub.f32 %v241, %v268
    %v290 = vsub.f32 %v242, %v270
    %v291 = vsub.f32 %v243, %v272
    %v292 = vsub.f32 %v244, %v274
    %v293 = vsub.f32 %v245, %v276
    %v294 = vsub.f32 %v246, %v278
    %v295 = vmul.f32 %v279, 1.442695
    %v296 = vpow.pop %v295
    %v297 = vmul.f32 %v280, 1.442695
    %v298 = vpow.pop %v297
    %v299 = vmul.f32 %v281, 1.442695
    %v300 = vpow.pop %v299
    %v301 = vmul.f32 %v282, 1.442695
    %v302 = vpow.pop %v301
    %v303 = vmul.f32 %v283, 1.442695
    %v304 = vpow.pop %v303
    %v305 = vmul.f32 %v284, 1.442695
    %v306 = vpow.pop %v305
    %v307 = vmul.f32 %v285, 1.442695
    %v308 = vpow.pop %v307
    %v309 = vmul.f32 %v286, 1.442695
    %v310 = vpow.pop %v309
    %v311 = vmul.f32 %v287, 1.442695
    %v312 = vpow.pop %v311
    %v313 = vmul.f32 %v288, 1.442695
    %v314 = vpow.pop %v313
    %v315 = vmul.f32 %v289, 1.442695
    %v316 = vpow.pop %v315
    %v317 = vmul.f32 %v290, 1.442695
    %v318 = vpow.pop %v317
    %v319 = vmul.f32 %v291, 1.442695
    %v320 = vpow.pop %v319
    %v321 = vmul.f32 %v292, 1.442695
    %v322 = vpow.pop %v321
    %v323 = vmul.f32 %v293, 1.442695
    %v324 = vpow.pop %v323
    %v325 = vmul.f32 %v294, 1.442695
    %v326 = vpow.pop %v325
    %v327 = vpack.c.bf16 %v298, %v296
    %v328 = vpack.c.bf16 %v302, %v300
    %v329 = vpack.c.bf16 %v306, %v304
    %v330 = vpack.c.bf16 %v310, %v308
    %v331 = vpack.c.bf16 %v314, %v312
    %v332 = vpack.c.bf16 %v318, %v316
    %v333 = vpack.c.bf16 %v322, %v320
    %v334 = vpack.c.bf16 %v326, %v324
    %v335 = vld [vmem:[%s3] sm:$0xf]
    %v336 = vld [vmem:[%s3 + $0x4] sm:$0xf]
    %v337 = vld [vmem:[%s3 + $0x8] sm:$0xf]
    %v338 = vld [vmem:[%s3 + $0xc] sm:$0xf]
    %v339 = vld [vmem:[%s3 + $0x10] sm:$0xf]
    %v340 = vld [vmem:[%s3 + $0x14] sm:$0xf]
    %v341 = vld [vmem:[%s3 + $0x18] sm:$0xf]
    %v342 = vld [vmem:[%s3 + $0x1c] sm:$0xf]
    %v343 = vld [vmem:[%s3 + $0x20] sm:$0xf]
    %v344 = vld [vmem:[%s3 + $0x24] sm:$0xf]
    %v345 = vld [vmem:[%s3 + $0x28] sm:$0xf]
    %v346 = vld [vmem:[%s3 + $0x2c] sm:$0xf]
    %v347 = vld [vmem:[%s3 + $0x30] sm:$0xf]
    %v348 = vld [vmem:[%s3 + $0x34] sm:$0xf]
    %v349 = vld [vmem:[%s3 + $0x38] sm:$0xf]
    %v350 = vld [vmem:[%s3 + $0x3c] sm:$0xf]
    %v367 = vunpack.c.l.b16 %v335
    %v368 = vunpack.c.l.b16 %v336
    %v369 = vunpack.c.l.b16 %v337
    %v370 = vunpack.c.l.b16 %v338
    %v371 = vunpack.c.l.b16 %v339
    %v372 = vunpack.c.l.b16 %v340
    %v373 = vunpack.c.l.b16 %v341
    %v374 = vunpack.c.l.b16 %v342
    %v375 = vunpack.c.l.b16 %v343
    %v376 = vunpack.c.l.b16 %v344
    %v377 = vunpack.c.l.b16 %v345
    %v378 = vunpack.c.l.b16 %v346
    %v379 = vunpack.c.l.b16 %v347
    %v380 = vunpack.c.l.b16 %v348
    %v381 = vunpack.c.l.b16 %v349
    %v382 = vunpack.c.l.b16 %v350
    %v383 = vpack.c.b16 %v368, %v367
    %v384 = vpack.c.b16 %v370, %v369
    %v385 = vpack.c.b16 %v372, %v371
    %v386 = vpack.c.b16 %v374, %v373
    %v387 = vpack.c.b16 %v376, %v375
    %v388 = vpack.c.b16 %v378, %v377
    %v389 = vpack.c.b16 %v380, %v379
    %v390 = vpack.c.b16 %v382, %v381
    %399 = vmatpush.bf16.msra.mxu0 %v390
    %400 = vmatpush.bf16.msra.mxu0 %v389
    %401 = vmatpush.bf16.msra.mxu0 %v388
    %402 = vmatpush.bf16.msra.mxu0 %v387
    %403 = vmatpush.bf16.msra.mxu0 %v386
    %404 = vmatpush.bf16.msra.mxu0 %v385
    %405 = vmatpush.bf16.msra.mxu0 %v384
    %406 = vmatpush.bf16.msra.mxu0 %v383
    %407 = vmatmul.bf16.gmra.mxu0 %v327
    %v408 = vpop.f32.mrf.mxu0
    %v409 = vadd.f32 0.0, %v408
    %v410 = vpop.f32.mrf.mxu0
    %v411 = vadd.f32 0.0, %v410
    %412 = vmatmul.bf16.gmra.mxu0 %v328
    %v413 = vpop.f32.mrf.mxu0
    %v414 = vadd.f32 0.0, %v413
    %v415 = vpop.f32.mrf.mxu0
    %v416 = vadd.f32 0.0, %v415
    %417 = vmatmul.bf16.gmra.mxu0 %v329
    %v418 = vpop.f32.mrf.mxu0
    %v419 = vadd.f32 0.0, %v418
    %v420 = vpop.f32.mrf.mxu0
    %v421 = vadd.f32 0.0, %v420
    %422 = vmatmul.bf16.gmra.mxu0 %v330
    %v423 = vpop.f32.mrf.mxu0
    %v424 = vadd.f32 0.0, %v423
    %v425 = vpop.f32.mrf.mxu0
    %v426 = vadd.f32 0.0, %v425
    %427 = vmatmul.bf16.gmra.mxu0 %v331
    %v428 = vpop.f32.mrf.mxu0
    %v429 = vadd.f32 0.0, %v428
    %v430 = vpop.f32.mrf.mxu0
    %v431 = vadd.f32 0.0, %v430
    %432 = vmatmul.bf16.gmra.mxu0 %v332
    %v433 = vpop.f32.mrf.mxu0
    %v434 = vadd.f32 0.0, %v433
    %v435 = vpop.f32.mrf.mxu0
    %v436 = vadd.f32 0.0, %v435
    %437 = vmatmul.bf16.gmra.mxu0 %v333
    %v438 = vpop.f32.mrf.mxu0
    %v439 = vadd.f32 0.0, %v438
    %v440 = vpop.f32.mrf.mxu0
    %v441 = vadd.f32 0.0, %v440
    %442 = vmatmul.bf16.gmra.mxu0 %v334
    %v443 = vpop.f32.mrf.mxu0
    %v444 = vadd.f32 0.0, %v443
    %v445 = vpop.f32.mrf.mxu0
    %v446 = vadd.f32 0.0, %v445
    %447 = vdwg.mxu0
    %v448 = vrcp.pop %v409
    %v449 = vrcp.pop %v411
    %v450 = vrcp.pop %v414
    %v451 = vrcp.pop %v416
    %v452 = vrcp.pop %v419
    %v453 = vrcp.pop %v421
    %v454 = vrcp.pop %v424
    %v455 = vrcp.pop %v426
    %v456 = vrcp.pop %v429
    %v457 = vrcp.pop %v431
    %v458 = vrcp.pop %v434
    %v459 = vrcp.pop %v436
    %v460 = vrcp.pop %v439
    %v461 = vrcp.pop %v441
    %v462 = vrcp.pop %v444
    %v463 = vrcp.pop %v446
    %465 = vset.pattern.permute.xlu0 64
    %466 = vperm.xlu0 %465, %v448
    %v467 = vpop.permute.xlu0 %466
    %470 = vset.pattern.permute.xlu0 64
    %471 = vperm.xlu0 %470, %v449
    %v472 = vpop.permute.xlu0 %471
    %475 = vset.pattern.permute.xlu0 64
    %476 = vperm.xlu0 %475, %v450
    %v477 = vpop.permute.xlu0 %476
    %480 = vset.pattern.permute.xlu0 64
    %481 = vperm.xlu0 %480, %v451
    %v482 = vpop.permute.xlu0 %481
    %485 = vset.pattern.permute.xlu0 64
    %486 = vperm.xlu0 %485, %v452
    %v487 = vpop.permute.xlu0 %486
    %490 = vset.pattern.permute.xlu0 64
    %491 = vperm.xlu0 %490, %v453
    %v492 = vpop.permute.xlu0 %491
    %495 = vset.pattern.permute.xlu0 64
    %496 = vperm.xlu0 %495, %v454
    %v497 = vpop.permute.xlu0 %496
    %500 = vset.pattern.permute.xlu0 64
    %501 = vperm.xlu0 %500, %v455
    %v502 = vpop.permute.xlu0 %501
    %505 = vset.pattern.permute.xlu0 64
    %506 = vperm.xlu0 %505, %v456
    %v507 = vpop.permute.xlu0 %506
    %510 = vset.pattern.permute.xlu0 64
    %511 = vperm.xlu0 %510, %v457
    %v512 = vpop.permute.xlu0 %511
    %515 = vset.pattern.permute.xlu0 64
    %516 = vperm.xlu0 %515, %v458
    %v517 = vpop.permute.xlu0 %516
    %520 = vset.pattern.permute.xlu0 64
    %521 = vperm.xlu0 %520, %v459
    %v522 = vpop.permute.xlu0 %521
    %525 = vset.pattern.permute.xlu0 64
    %526 = vperm.xlu0 %525, %v460
    %v527 = vpop.permute.xlu0 %526
    %530 = vset.pattern.permute.xlu0 64
    %531 = vperm.xlu0 %530, %v461
    %v532 = vpop.permute.xlu0 %531
    %535 = vset.pattern.permute.xlu0 64
    %536 = vperm.xlu0 %535, %v462
    %v537 = vpop.permute.xlu0 %536
    %540 = vset.pattern.permute.xlu0 64
    %541 = vperm.xlu0 %540, %v463
    %v542 = vpop.permute.xlu0 %541
    %v544 = vmul.f32 %v409, %v467
    %v545 = vmul.f32 %v411, %v472
    %v546 = vmul.f32 %v414, %v477
    %v547 = vmul.f32 %v416, %v482
    %v548 = vmul.f32 %v419, %v487
    %v549 = vmul.f32 %v421, %v492
    %v550 = vmul.f32 %v424, %v497
    %v551 = vmul.f32 %v426, %v502
    %v552 = vmul.f32 %v429, %v507
    %v553 = vmul.f32 %v431, %v512
    %v554 = vmul.f32 %v434, %v517
    %v555 = vmul.f32 %v436, %v522
    %v556 = vmul.f32 %v439, %v527
    %v557 = vmul.f32 %v441, %v532
    %v558 = vmul.f32 %v444, %v537
    %v559 = vmul.f32 %v446, %v542
    %560 = vset.pattern.permute.xlu0 1
    %561 = vperm.xlu0 %560, %v70
    %v562 = vpop.permute.xlu0 %561
    %564 = vset.pattern.permute.xlu0 1
    %565 = vperm.xlu0 %564, %v71
    %v566 = vpop.permute.xlu0 %565
    %568 = vset.pattern.permute.xlu0 1
    %569 = vperm.xlu0 %568, %v72
    %v570 = vpop.permute.xlu0 %569
    %572 = vset.pattern.permute.xlu0 1
    %573 = vperm.xlu0 %572, %v73
    %v574 = vpop.permute.xlu0 %573
    %576 = vset.pattern.permute.xlu0 1
    %577 = vperm.xlu0 %576, %v74
    %v578 = vpop.permute.xlu0 %577
    %580 = vset.pattern.permute.xlu0 1
    %581 = vperm.xlu0 %580, %v75
    %v582 = vpop.permute.xlu0 %581
    %584 = vset.pattern.permute.xlu0 1
    %585 = vperm.xlu0 %584, %v76
    %v586 = vpop.permute.xlu0 %585
    %588 = vset.pattern.permute.xlu0 1
    %589 = vperm.xlu0 %588, %v77
    %v590 = vpop.permute.xlu0 %589
    %592 = vset.pattern.permute.xlu0 1
    %593 = vperm.xlu0 %592, %v78
    %v594 = vpop.permute.xlu0 %593
    %596 = vset.pattern.permute.xlu0 1
    %597 = vperm.xlu0 %596, %v79
    %v598 = vpop.permute.xlu0 %597
    %600 = vset.pattern.permute.xlu0 1
    %601 = vperm.xlu0 %600, %v80
    %v602 = vpop.permute.xlu0 %601
    %604 = vset.pattern.permute.xlu0 1
    %605 = vperm.xlu0 %604, %v81
    %v606 = vpop.permute.xlu0 %605
    %608 = vset.pattern.permute.xlu0 1
    %609 = vperm.xlu0 %608, %v82
    %v610 = vpop.permute.xlu0 %609
    %612 = vset.pattern.permute.xlu0 1
    %613 = vperm.xlu0 %612, %v83
    %v614 = vpop.permute.xlu0 %613
    %616 = vset.pattern.permute.xlu0 1
    %617 = vperm.xlu0 %616, %v84
    %v618 = vpop.permute.xlu0 %617
    %620 = vset.pattern.permute.xlu0 1
    %621 = vperm.xlu0 %620, %v85
    %v622 = vpop.permute.xlu0 %621
    %v624 = vperm.slane %v69, 1
    %v625 = vadd.f32 %v562, %v624
    %v626 = vadd.f32 %v566, %v624
    %v627 = vadd.f32 %v570, %v624
    %v628 = vadd.f32 %v574, %v624
    %v629 = vadd.f32 %v578, %v624
    %v630 = vadd.f32 %v582, %v624
    %v631 = vadd.f32 %v586, %v624
    %v632 = vadd.f32 %v590, %v624
    %v633 = vadd.f32 %v594, %v624
    %v634 = vadd.f32 %v598, %v624
    %v635 = vadd.f32 %v602, %v624
    %v636 = vadd.f32 %v606, %v624
    %v637 = vadd.f32 %v610, %v624
    %v638 = vadd.f32 %v614, %v624
    %v639 = vadd.f32 %v618, %v624
    %v640 = vadd.f32 %v622, %v624
    %vm641 = vcmp.gt.f32.partialorder %v625, 0.0
    %vm642 = vcmp.gt.f32.partialorder %v626, 0.0
    %vm643 = vcmp.gt.f32.partialorder %v627, 0.0
    %vm644 = vcmp.gt.f32.partialorder %v628, 0.0
    %vm645 = vcmp.gt.f32.partialorder %v629, 0.0
    %vm646 = vcmp.gt.f32.partialorder %v630, 0.0
    %vm647 = vcmp.gt.f32.partialorder %v631, 0.0
    %vm648 = vcmp.gt.f32.partialorder %v632, 0.0
    %vm649 = vcmp.gt.f32.partialorder %v633, 0.0
    %vm650 = vcmp.gt.f32.partialorder %v634, 0.0
    %vm651 = vcmp.gt.f32.partialorder %v635, 0.0
    %vm652 = vcmp.gt.f32.partialorder %v636, 0.0
    %vm653 = vcmp.gt.f32.partialorder %v637, 0.0
    %vm654 = vcmp.gt.f32.partialorder %v638, 0.0
    %vm655 = vcmp.gt.f32.partialorder %v639, 0.0
    %vm656 = vcmp.gt.f32.partialorder %v640, 0.0
    %v657 = vmul.f32 %v625, 0.2
    %v658 = vmul.f32 %v626, 0.2
    %v659 = vmul.f32 %v627, 0.2
    %v660 = vmul.f32 %v628, 0.2
    %v661 = vmul.f32 %v629, 0.2
    %v662 = vmul.f32 %v630, 0.2
    %v663 = vmul.f32 %v631, 0.2
    %v664 = vmul.f32 %v632, 0.2
    %v665 = vmul.f32 %v633, 0.2
    %v666 = vmul.f32 %v634, 0.2
    %v667 = vmul.f32 %v635, 0.2
    %v668 = vmul.f32 %v636, 0.2
    %v669 = vmul.f32 %v637, 0.2
    %v670 = vmul.f32 %v638, 0.2
    %v671 = vmul.f32 %v639, 0.2
    %v672 = vmul.f32 %v640, 0.2
    %v673 = vsel %vm641, %v625, %v657
    %v674 = vsel %vm642, %v626, %v658
    %v675 = vsel %vm643, %v627, %v659
    %v676 = vsel %vm644, %v628, %v660
    %v677 = vsel %vm645, %v629, %v661
    %v678 = vsel %vm646, %v630, %v662
    %v679 = vsel %vm647, %v631, %v663
    %v680 = vsel %vm648, %v632, %v664
    %v681 = vsel %vm649, %v633, %v665
    %v682 = vsel %vm650, %v634, %v666
    %v683 = vsel %vm651, %v635, %v667
    %v684 = vsel %vm652, %v636, %v668
    %v685 = vsel %vm653, %v637, %v669
    %v686 = vsel %vm654, %v638, %v670
    %v687 = vsel %vm655, %v639, %v671
    %v688 = vsel %vm656, %v640, %v672
    %v689 = vadd.f32 %v673, %v53
    %v690 = vadd.f32 %v674, %v54
    %v691 = vadd.f32 %v675, %v55
    %v692 = vadd.f32 %v676, %v56
    %v693 = vadd.f32 %v677, %v57
    %v694 = vadd.f32 %v678, %v58
    %v695 = vadd.f32 %v679, %v59
    %v696 = vadd.f32 %v680, %v60
    %v697 = vadd.f32 %v681, %v61
    %v698 = vadd.f32 %v682, %v62
    %v699 = vadd.f32 %v683, %v63
    %v700 = vadd.f32 %v684, %v64
    %v701 = vadd.f32 %v685, %v65
    %v702 = vadd.f32 %v686, %v66
    %v703 = vadd.f32 %v687, %v67
    %v704 = vadd.f32 %v688, %v68
    %705 = vmax.xlane.f32.xlu0 %v689
    %v706 = vpop.xlane.xlu0 %705
    %707 = vmax.xlane.f32.xlu0 %v690
    %v708 = vpop.xlane.xlu0 %707
    %709 = vmax.xlane.f32.xlu0 %v691
    %v710 = vpop.xlane.xlu0 %709
    %711 = vmax.xlane.f32.xlu0 %v692
    %v712 = vpop.xlane.xlu0 %711
    %713 = vmax.xlane.f32.xlu0 %v693
    %v714 = vpop.xlane.xlu0 %713
    %715 = vmax.xlane.f32.xlu0 %v694
    %v716 = vpop.xlane.xlu0 %715
    %717 = vmax.xlane.f32.xlu0 %v695
    %v718 = vpop.xlane.xlu0 %717
    %719 = vmax.xlane.f32.xlu0 %v696
    %v720 = vpop.xlane.xlu0 %719
    %721 = vmax.xlane.f32.xlu0 %v697
    %v722 = vpop.xlane.xlu0 %721
    %723 = vmax.xlane.f32.xlu0 %v698
    %v724 = vpop.xlane.xlu0 %723
    %725 = vmax.xlane.f32.xlu0 %v699
    %v726 = vpop.xlane.xlu0 %725
    %727 = vmax.xlane.f32.xlu0 %v700
    %v728 = vpop.xlane.xlu0 %727
    %729 = vmax.xlane.f32.xlu0 %v701
    %v730 = vpop.xlane.xlu0 %729
    %731 = vmax.xlane.f32.xlu0 %v702
    %v732 = vpop.xlane.xlu0 %731
    %733 = vmax.xlane.f32.xlu0 %v703
    %v734 = vpop.xlane.xlu0 %733
    %735 = vmax.xlane.f32.xlu0 %v704
    %v736 = vpop.xlane.xlu0 %735
    %v737 = vsub.f32 %v689, %v706
    %v738 = vsub.f32 %v690, %v708
    %v739 = vsub.f32 %v691, %v710
    %v740 = vsub.f32 %v692, %v712
    %v741 = vsub.f32 %v693, %v714
    %v742 = vsub.f32 %v694, %v716
    %v743 = vsub.f32 %v695, %v718
    %v744 = vsub.f32 %v696, %v720
    %v745 = vsub.f32 %v697, %v722
    %v746 = vsub.f32 %v698, %v724
    %v747 = vsub.f32 %v699, %v726
    %v748 = vsub.f32 %v700, %v728
    %v749 = vsub.f32 %v701, %v730
    %v750 = vsub.f32 %v702, %v732
    %v751 = vsub.f32 %v703, %v734
    %v752 = vsub.f32 %v704, %v736
    %v753 = vmul.f32 %v737, 1.442695
    %v754 = vpow.pop %v753
    %v755 = vmul.f32 %v738, 1.442695
    %v756 = vpow.pop %v755
    %v757 = vmul.f32 %v739, 1.442695
    %v758 = vpow.pop %v757
    %v759 = vmul.f32 %v740, 1.442695
    %v760 = vpow.pop %v759
    %v761 = vmul.f32 %v741, 1.442695
    %v762 = vpow.pop %v761
    %v763 = vmul.f32 %v742, 1.442695
    %v764 = vpow.pop %v763
    %v765 = vmul.f32 %v743, 1.442695
    %v766 = vpow.pop %v765
    %v767 = vmul.f32 %v744, 1.442695
    %v768 = vpow.pop %v767
    %v769 = vmul.f32 %v745, 1.442695
    %v770 = vpow.pop %v769
    %v771 = vmul.f32 %v746, 1.442695
    %v772 = vpow.pop %v771
    %v773 = vmul.f32 %v747, 1.442695
    %v774 = vpow.pop %v773
    %v775 = vmul.f32 %v748, 1.442695
    %v776 = vpow.pop %v775
    %v777 = vmul.f32 %v749, 1.442695
    %v778 = vpow.pop %v777
    %v779 = vmul.f32 %v750, 1.442695
    %v780 = vpow.pop %v779
    %v781 = vmul.f32 %v751, 1.442695
    %v782 = vpow.pop %v781
    %v783 = vmul.f32 %v752, 1.442695
    %v784 = vpow.pop %v783
    %v785 = vpack.c.bf16 %v756, %v754
    %v786 = vpack.c.bf16 %v760, %v758
    %v787 = vpack.c.bf16 %v764, %v762
    %v788 = vpack.c.bf16 %v768, %v766
    %v789 = vpack.c.bf16 %v772, %v770
    %v790 = vpack.c.bf16 %v776, %v774
    %v791 = vpack.c.bf16 %v780, %v778
    %v792 = vpack.c.bf16 %v784, %v782
    %s793 = scalar_lea.vmem %s3, 64
    %v794 = vld [vmem:[%s793] sm:$0xf]
    %v795 = vld [vmem:[%s793 + $0x4] sm:$0xf]
    %v796 = vld [vmem:[%s793 + $0x8] sm:$0xf]
    %v797 = vld [vmem:[%s793 + $0xc] sm:$0xf]
    %v798 = vld [vmem:[%s793 + $0x10] sm:$0xf]
    %v799 = vld [vmem:[%s793 + $0x14] sm:$0xf]
    %v800 = vld [vmem:[%s793 + $0x18] sm:$0xf]
    %v801 = vld [vmem:[%s793 + $0x1c] sm:$0xf]
    %v802 = vld [vmem:[%s793 + $0x20] sm:$0xf]
    %v803 = vld [vmem:[%s793 + $0x24] sm:$0xf]
    %v804 = vld [vmem:[%s793 + $0x28] sm:$0xf]
    %v805 = vld [vmem:[%s793 + $0x2c] sm:$0xf]
    %v806 = vld [vmem:[%s793 + $0x30] sm:$0xf]
    %v807 = vld [vmem:[%s793 + $0x34] sm:$0xf]
    %v808 = vld [vmem:[%s793 + $0x38] sm:$0xf]
    %v809 = vld [vmem:[%s793 + $0x3c] sm:$0xf]
    %v826 = vunpack.c.l.b16 %v794
    %v827 = vunpack.c.l.b16 %v795
    %v828 = vunpack.c.l.b16 %v796
    %v829 = vunpack.c.l.b16 %v797
    %v830 = vunpack.c.l.b16 %v798
    %v831 = vunpack.c.l.b16 %v799
    %v832 = vunpack.c.l.b16 %v800
    %v833 = vunpack.c.l.b16 %v801
    %v834 = vunpack.c.l.b16 %v802
    %v835 = vunpack.c.l.b16 %v803
    %v836 = vunpack.c.l.b16 %v804
    %v837 = vunpack.c.l.b16 %v805
    %v838 = vunpack.c.l.b16 %v806
    %v839 = vunpack.c.l.b16 %v807
    %v840 = vunpack.c.l.b16 %v808
    %v841 = vunpack.c.l.b16 %v809
    %v842 = vpack.c.b16 %v827, %v826
    %v843 = vpack.c.b16 %v829, %v828
    %v844 = vpack.c.b16 %v831, %v830
    %v845 = vpack.c.b16 %v833, %v832
    %v846 = vpack.c.b16 %v835, %v834
    %v847 = vpack.c.b16 %v837, %v836
    %v848 = vpack.c.b16 %v839, %v838
    %v849 = vpack.c.b16 %v841, %v840
    %858 = vmatpush.bf16.msra.mxu0 %v849
    %859 = vmatpush.bf16.msra.mxu0 %v848
    %860 = vmatpush.bf16.msra.mxu0 %v847
    %861 = vmatpush.bf16.msra.mxu0 %v846
    %862 = vmatpush.bf16.msra.mxu0 %v845
    %863 = vmatpush.bf16.msra.mxu0 %v844
    %864 = vmatpush.bf16.msra.mxu0 %v843
    %865 = vmatpush.bf16.msra.mxu0 %v842
    %866 = vmatmul.bf16.gmra.mxu0 %v785
    %v867 = vpop.f32.mrf.mxu0
    %v868 = vadd.f32 0.0, %v867
    %v869 = vpop.f32.mrf.mxu0
    %v870 = vadd.f32 0.0, %v869
    %871 = vmatmul.bf16.gmra.mxu0 %v786
    %v872 = vpop.f32.mrf.mxu0
    %v873 = vadd.f32 0.0, %v872
    %v874 = vpop.f32.mrf.mxu0
    %v875 = vadd.f32 0.0, %v874
    %876 = vmatmul.bf16.gmra.mxu0 %v787
    %v877 = vpop.f32.mrf.mxu0
    %v878 = vadd.f32 0.0, %v877
    %v879 = vpop.f32.mrf.mxu0
    %v880 = vadd.f32 0.0, %v879
    %881 = vmatmul.bf16.gmra.mxu0 %v788
    %v882 = vpop.f32.mrf.mxu0
    %v883 = vadd.f32 0.0, %v882
    %v884 = vpop.f32.mrf.mxu0
    %v885 = vadd.f32 0.0, %v884
    %886 = vmatmul.bf16.gmra.mxu0 %v789
    %v887 = vpop.f32.mrf.mxu0
    %v888 = vadd.f32 0.0, %v887
    %v889 = vpop.f32.mrf.mxu0
    %v890 = vadd.f32 0.0, %v889
    %891 = vmatmul.bf16.gmra.mxu0 %v790
    %v892 = vpop.f32.mrf.mxu0
    %v893 = vadd.f32 0.0, %v892
    %v894 = vpop.f32.mrf.mxu0
    %v895 = vadd.f32 0.0, %v894
    %896 = vmatmul.bf16.gmra.mxu0 %v791
    %v897 = vpop.f32.mrf.mxu0
    %v898 = vadd.f32 0.0, %v897
    %v899 = vpop.f32.mrf.mxu0
    %v900 = vadd.f32 0.0, %v899
    %901 = vmatmul.bf16.gmra.mxu0 %v792
    %v902 = vpop.f32.mrf.mxu0
    %v903 = vadd.f32 0.0, %v902
    %v904 = vpop.f32.mrf.mxu0
    %v905 = vadd.f32 0.0, %v904
    %906 = vdwg.mxu0
    %v907 = vrcp.pop %v868
    %v908 = vrcp.pop %v870
    %v909 = vrcp.pop %v873
    %v910 = vrcp.pop %v875
    %v911 = vrcp.pop %v878
    %v912 = vrcp.pop %v880
    %v913 = vrcp.pop %v883
    %v914 = vrcp.pop %v885
    %v915 = vrcp.pop %v888
    %v916 = vrcp.pop %v890
    %v917 = vrcp.pop %v893
    %v918 = vrcp.pop %v895
    %v919 = vrcp.pop %v898
    %v920 = vrcp.pop %v900
    %v921 = vrcp.pop %v903
    %v922 = vrcp.pop %v905
    %924 = vset.pattern.permute.xlu0 64
    %925 = vperm.xlu0 %924, %v907
    %v926 = vpop.permute.xlu0 %925
    %929 = vset.pattern.permute.xlu0 64
    %930 = vperm.xlu0 %929, %v908
    %v931 = vpop.permute.xlu0 %930
    %934 = vset.pattern.permute.xlu0 64
    %935 = vperm.xlu0 %934, %v909
    %v936 = vpop.permute.xlu0 %935
    %939 = vset.pattern.permute.xlu0 64
    %940 = vperm.xlu0 %939, %v910
    %v941 = vpop.permute.xlu0 %940
    %944 = vset.pattern.permute.xlu0 64
    %945 = vperm.xlu0 %944, %v911
    %v946 = vpop.permute.xlu0 %945
    %949 = vset.pattern.permute.xlu0 64
    %950 = vperm.xlu0 %949, %v912
    %v951 = vpop.permute.xlu0 %950
    %954 = vset.pattern.permute.xlu0 64
    %955 = vperm.xlu0 %954, %v913
    %v956 = vpop.permute.xlu0 %955
    %959 = vset.pattern.permute.xlu0 64
    %960 = vperm.xlu0 %959, %v914
    %v961 = vpop.permute.xlu0 %960
    %964 = vset.pattern.permute.xlu0 64
    %965 = vperm.xlu0 %964, %v915
    %v966 = vpop.permute.xlu0 %965
    %969 = vset.pattern.permute.xlu0 64
    %970 = vperm.xlu0 %969, %v916
    %v971 = vpop.permute.xlu0 %970
    %974 = vset.pattern.permute.xlu0 64
    %975 = vperm.xlu0 %974, %v917
    %v976 = vpop.permute.xlu0 %975
    %979 = vset.pattern.permute.xlu0 64
    %980 = vperm.xlu0 %979, %v918
    %v981 = vpop.permute.xlu0 %980
    %984 = vset.pattern.permute.xlu0 64
    %985 = vperm.xlu0 %984, %v919
    %v986 = vpop.permute.xlu0 %985
    %989 = vset.pattern.permute.xlu0 64
    %990 = vperm.xlu0 %989, %v920
    %v991 = vpop.permute.xlu0 %990
    %994 = vset.pattern.permute.xlu0 64
    %995 = vperm.xlu0 %994, %v921
    %v996 = vpop.permute.xlu0 %995
    %999 = vset.pattern.permute.xlu0 64
    %1000 = vperm.xlu0 %999, %v922
    %v1001 = vpop.permute.xlu0 %1000
    %v1003 = vmul.f32 %v868, %v926
    %v1004 = vmul.f32 %v870, %v931
    %v1005 = vmul.f32 %v873, %v936
    %v1006 = vmul.f32 %v875, %v941
    %v1007 = vmul.f32 %v878, %v946
    %v1008 = vmul.f32 %v880, %v951
    %v1009 = vmul.f32 %v883, %v956
    %v1010 = vmul.f32 %v885, %v961
    %v1011 = vmul.f32 %v888, %v966
    %v1012 = vmul.f32 %v890, %v971
    %v1013 = vmul.f32 %v893, %v976
    %v1014 = vmul.f32 %v895, %v981
    %v1015 = vmul.f32 %v898, %v986
    %v1016 = vmul.f32 %v900, %v991
    %v1017 = vmul.f32 %v903, %v996
    %v1018 = vmul.f32 %v905, %v1001
    %v1019 = vadd.f32 %v544, %v1003
    %v1020 = vadd.f32 %v545, %v1004
    %v1021 = vadd.f32 %v546, %v1005
    %v1022 = vadd.f32 %v547, %v1006
    %v1023 = vadd.f32 %v548, %v1007
    %v1024 = vadd.f32 %v549, %v1008
    %v1025 = vadd.f32 %v550, %v1009
    %v1026 = vadd.f32 %v551, %v1010
    %v1027 = vadd.f32 %v552, %v1011
    %v1028 = vadd.f32 %v553, %v1012
    %v1029 = vadd.f32 %v554, %v1013
    %v1030 = vadd.f32 %v555, %v1014
    %v1031 = vadd.f32 %v556, %v1015
    %v1032 = vadd.f32 %v557, %v1016
    %v1033 = vadd.f32 %v558, %v1017
    %v1034 = vadd.f32 %v559, %v1018
    %v1035 = vld [vmem:[%s4] sm:$0x1]
    %v1037 = vperm.slane %v1035, 0
    %v1039 = vadd.f32 %v1019, %v1037
    %v1040 = vadd.f32 %v1020, %v1037
    %v1041 = vadd.f32 %v1021, %v1037
    %v1042 = vadd.f32 %v1022, %v1037
    %v1043 = vadd.f32 %v1023, %v1037
    %v1044 = vadd.f32 %v1024, %v1037
    %v1045 = vadd.f32 %v1025, %v1037
    %v1046 = vadd.f32 %v1026, %v1037
    %v1047 = vadd.f32 %v1027, %v1037
    %v1048 = vadd.f32 %v1028, %v1037
    %v1049 = vadd.f32 %v1029, %v1037
    %v1050 = vadd.f32 %v1030, %v1037
    %v1051 = vadd.f32 %v1031, %v1037
    %v1052 = vadd.f32 %v1032, %v1037
    %v1053 = vadd.f32 %v1033, %v1037
    %v1054 = vadd.f32 %v1034, %v1037
    %1055 = vst [vmem:[#allocation5] sm:$0xff] %v1039
    %1056 = vst [vmem:[#allocation5 + $0x8] sm:$0xff] %v1040
    %1057 = vst [vmem:[#allocation5 + $0x10] sm:$0xff] %v1041
    %1058 = vst [vmem:[#allocation5 + $0x18] sm:$0xff] %v1042
    %1059 = vst [vmem:[#allocation5 + $0x20] sm:$0xff] %v1043
    %1060 = vst [vmem:[#allocation5 + $0x28] sm:$0xff] %v1044
    %1061 = vst [vmem:[#allocation5 + $0x30] sm:$0xff] %v1045
    %1062 = vst [vmem:[#allocation5 + $0x38] sm:$0xff] %v1046
    %1063 = vst [vmem:[#allocation5 + $0x40] sm:$0xff] %v1047
    %1064 = vst [vmem:[#allocation5 + $0x48] sm:$0xff] %v1048
    %1065 = vst [vmem:[#allocation5 + $0x50] sm:$0xff] %v1049
    %1066 = vst [vmem:[#allocation5 + $0x58] sm:$0xff] %v1050
    %1067 = vst [vmem:[#allocation5 + $0x60] sm:$0xff] %v1051
    %1068 = vst [vmem:[#allocation5 + $0x68] sm:$0xff] %v1052
    %1069 = vst [vmem:[#allocation5 + $0x70] sm:$0xff] %v1053
    %1070 = vst [vmem:[#allocation5 + $0x78] sm:$0xff] %v1054
    // Predicated region
    $region26: #{tpu_custom_call.1} parent=1 // pred_check
      _
    $region27: #{tpu_custom_call.1} parent=1 // pred_check_branch
      %1072 = sbr.rel (0) target = $region29
    $region28: #{tpu_custom_call.1} parent=1 // pred_region
      %1074 = vsyncadd [#allocation4], 0
      %s1075 = sshll.u32 [#allocation5], 4
      %s1076 = int_to_ptr.vmem [resolvable:$true] %s1075
      %s1077 = sshll.u32 %s5, 4
      %s1078 = int_to_ptr.hbm [resolvable:$true] %s1077
      %1083 = dma.vmem_to_hbm [thread:$0]  %s1076, 2048, %s1078, [#allocation4], 128, 128, 8
    $region29: #{tpu_custom_call.1} parent=1 // pred_fallthru
      _
    // Predicated region
    $region30: #{tpu_custom_call.1} parent=1 // pred_check
      _
    $region31: #{tpu_custom_call.1} parent=1 // pred_check_branch
      %1085 = sbr.rel (0) target = $region33
    $region32: #{tpu_custom_call.1} parent=1 // pred_region
      %1087 = dma.done [#allocation4], 2048
    $region33: #{tpu_custom_call.1} parent=1 // pred_fallthru
      _
    %1088 = vsyncpa [#allocation3], 1
    %1089 = vsyncpa [#allocation4], 1

</llo_original>
